<compile_context>
chip_gen: v7x
topology: tpu7x:2x2x1
jax: 0.10.0
libtpu: 0.0.40
codegen_flags: <defaults>
</compile_context>

<pallas_src>
import functools

import numpy as np

import jax
import jax.numpy as jnp
from jax import lax
from jax.experimental import pallas as pl
from jax.experimental.pallas import tpu as pltpu


def _round_up(x, m):
    return -(-x // m) * m


def _pick_tile(hw_pad):
    # Largest lane-dense pixel tile in the 128..512 range that divides HWpad.
    for t in (512, 384, 256, 128):
        if hw_pad % t == 0:
            return t
    return 128  # unreachable: hw_pad is a multiple of 128


def _pick_cout_chunk(cout, tn):
    # v5e/v6e: keep the live f32 accumulator per chunk around <=64 KiB
    # (~16 vregs). v7x (MRB) is less sensitive; chunking is harmless there.
    budget = 64 * 1024
    target = max(8, budget // (2 * tn * 4))
    if cout <= target:
        return cout
    for cand in range(target - target % 8, 7, -8):
        if cout % cand == 0:
            return cand
    return cout  # no clean chunking; keep single chunk


def _mfm_conv_kernel(edge_ref, x_ref, w_ref, b_ref, o_ref, p_ref,
                     *, Cin, W, PAD, K9, K9pad, TN, CC):
    """One (batch, pixel-tile) step of mfm: 3x3/s1/p1 conv + channel-split max.

    edge_ref: (2, TN)        bf16 {0,1} masks for this tile (row 0: w != 0,
                             row 1: w != W-1) — kill taps that wrap a row.
    x_ref:    (Cin, Ptot)    bf16 raw image, flattened pixels + halo zeros;
                             resident across the pixel-tile grid axis.
    w_ref:    (2*Cout, K9pad) bf16 weights, K order (kh, kw, cin), MFM halves
                             interleaved per Cout-chunk; resident.
    b_ref:    (2*Cout, 1)    f32 bias (same row order); resident.
    o_ref:    (Cout, TN)     output tile (channels on sublanes, pixels on lanes).
    p_ref:    (K9pad, TN)    bf16 VMEM scratch: in-kernel im2col operand.
    """
    n = pl.program_id(1)
    cout = o_ref.shape[0]
    nc = cout // CC

    # ---- in-kernel im2col: VMEM slices + cheap VPU masks, no HBM blow-up ----
    # Window of flattened pixels [n*TN - PAD, n*TN + TN + PAD): the dynamic
    # part of the offset is 128-aligned; the per-tap shift is a static slice.
    start = pl.multiple_of(n * TN, 128)
    window = x_ref[:, pl.ds(start, TN + 2 * PAD)]           # (Cin, TN + 2*PAD)

    not_left = edge_ref[0:1, :]                             # (1, TN)
    not_right = edge_ref[1:2, :]                            # (1, TN)

    t = 0
    for dh in (-1, 0, 1):
        for dw in (-1, 0, 1):
            d = dh * W + dw
            tap = window[:, PAD + d: PAD + d + TN]          # (Cin, TN)
            if dw == -1:
                tap = tap * not_left                        # zero w == 0 cols
            elif dw == 1:
                tap = tap * not_right                       # zero w == W-1 cols
            p_ref[t * Cin:(t + 1) * Cin, :] = tap
            t += 1
    if K9pad > K9:
        # K-padding rows must be real zeros (uninit VMEM could hold NaNs).
        p_ref[K9:, :] = jnp.zeros((K9pad - K9, TN), p_ref.dtype)

    patches = p_ref[...]                                    # (K9pad, TN) bf16

    # ---- one lane-dense MXU matmul per Cout-chunk, sublane-aligned MFM -----
    for c in range(nc):
        r0 = c * 2 * CC
        acc = jnp.dot(w_ref[r0:r0 + 2 * CC, :], patches,
                      preferred_element_type=jnp.float32)    # (2*CC, TN) f32
        acc = acc + b_ref[r0:r0 + 2 * CC, :]                 # bias broadcast
        o_ref[c * CC:(c + 1) * CC, :] = jnp.maximum(
            acc[:CC, :], acc[CC:, :]).astype(o_ref.dtype)


def mfm_conv(x_nchw, weight_oihw, bias):
    """mfm forward (type=1): Conv2d(Cin, 2*Cout, k=3, s=1, p=1) + max over the
    two Cout halves.  (B, Cin, H, W) -> (B, Cout, H, W), NCHW (PyTorch)."""
    B, Cin, H, W = x_nchw.shape
    Cout2 = weight_oihw.shape[0]
    Cout = Cout2 // 2
    HW = H * W

    # Lane-dense pixel tiling (never a non-128-multiple tile).
    HWpad = _round_up(HW, 128)
    TN = _pick_tile(HWpad)
    n_tiles = HWpad // TN
    CC = _pick_cout_chunk(Cout, TN)
    nc = Cout // CC

    # Halo padding on the flattened pixel axis: >= W+1 zeros at both ends so
    # the dh = +/-1 taps of the first/last image row read real zeros; rounded
    # to a multiple of 128 so the in-kernel window slice start stays aligned.
    PAD = _round_up(W + 1, 128)
    Ptot = PAD + HWpad + PAD

    K9 = 9 * Cin
    K9pad = _round_up(K9, 16)            # bf16 sublane packing of the K dim

    # ---- raw input: bf16 first, then flatten + halo pad (single fused pass) -
    xf = x_nchw.astype(jnp.bfloat16).reshape(B, Cin, HW)
    xf = jnp.pad(xf, ((0, 0), (0, 0), (PAD, PAD + HWpad - HW)))  # (B, Cin, Ptot)

    # ---- weights: OIHW -> (2*Cout, 9*Cin), K order (kh, kw, cin); MFM halves
    # interleaved per Cout-chunk so each chunk is one dot already in the
    # MXU-native (M,K) x (K,N) orientation (no in-kernel transposes).
    w2 = weight_oihw.transpose(0, 2, 3, 1).reshape(Cout2, K9)
    w2 = jnp.pad(w2, ((0, 0), (0, K9pad - K9)))
    wA = w2[:Cout].reshape(nc, CC, K9pad)
    wB = w2[Cout:].reshape(nc, CC, K9pad)
    w_perm = jnp.concatenate([wA, wB], axis=1).reshape(Cout2, K9pad)
    w_perm = w_perm.astype(jnp.bfloat16)

    bA = bias[:Cout].reshape(nc, CC, 1)
    bB = bias[Cout:].reshape(nc, CC, 1)
    b_perm = jnp.concatenate([bA, bB], axis=1).reshape(Cout2, 1)
    b_perm = b_perm.astype(jnp.float32)

    # {0,1} masks that zero the w-1 / w+1 taps which would otherwise wrap into
    # the neighbouring image row (top/bottom halo is handled by the zero pad).
    p_idx = np.arange(HWpad)
    edge_np = np.stack([(p_idx % W) != 0,
                        (p_idx % W) != (W - 1)]).astype(np.float32)
    edge = jnp.asarray(edge_np, dtype=jnp.bfloat16)               # (2, HWpad)

    kernel = functools.partial(
        _mfm_conv_kernel,
        Cin=Cin, W=W, PAD=PAD, K9=K9, K9pad=K9pad, TN=TN, CC=CC)

    out_flat = pl.pallas_call(
        kernel,
        out_shape=jax.ShapeDtypeStruct((B, Cout, HWpad), x_nchw.dtype),
        grid=(B, n_tiles),
        in_specs=[
            pl.BlockSpec((2, TN), lambda b, n: (0, n)),               # edge masks
            pl.BlockSpec((None, Cin, Ptot), lambda b, n: (b, 0, 0)),  # raw image (resident per b)
            pl.BlockSpec((Cout2, K9pad), lambda b, n: (0, 0)),        # weights (resident)
            pl.BlockSpec((Cout2, 1), lambda b, n: (0, 0)),            # bias (resident)
        ],
        out_specs=pl.BlockSpec((None, Cout, TN), lambda b, n: (b, 0, n)),
        scratch_shapes=[pltpu.VMEM((K9pad, TN), jnp.bfloat16)],
        compiler_params=pltpu.CompilerParams(
            dimension_semantics=("parallel", "parallel")),
    )(edge, xf, w_perm, b_perm)

    # Already channel-major: drop lane padding, un-flatten. No transpose.
    return out_flat[:, :, :HW].reshape(B, Cout, H, W)


def _reference_mfm(x_nchw, weight_oihw, bias):
    Cout = weight_oihw.shape[0] // 2
    y = lax.conv_general_dilated(
        x_nchw, weight_oihw,
        window_strides=(1, 1), padding="SAME",
        dimension_numbers=("NCHW", "OIHW", "NCHW"),
    ) + bias[None, :, None, None]
    return jnp.maximum(y[:, :Cout], y[:, Cout:])


if __name__ == "__main__":
    # Small shapes consistent with the module: batch=2, in_channels=4,
    # out_channels=8, spatial 16x16, kernel 3, stride 1, pad 1.
    B, Cin, Cout, H, W = 2, 4, 8, 16, 16

    key = jax.random.PRNGKey(0)
    kx, kw, kb = jax.random.split(key, 3)
    x = jax.random.normal(kx, (B, Cin, H, W), dtype=jnp.float32)
    weight = 0.1 * jax.random.normal(kw, (2 * Cout, Cin, 3, 3), dtype=jnp.float32)
    bias = 0.1 * jax.random.normal(kb, (2 * Cout,), dtype=jnp.float32)

    out = mfm_conv(x, weight, bias)
    out = jax.block_until_ready(out)
    assert out.shape == (B, Cout, H, W), out.shape

    # Tight check vs a reference fed the same bf16-rounded operands
    # (kernel uses bf16 MXU inputs with f32 accumulation).
    ref_bf16 = _reference_mfm(
        x.astype(jnp.bfloat16).astype(jnp.float32),
        weight.astype(jnp.bfloat16).astype(jnp.float32),
        bias,
    )
    assert jnp.allclose(out, ref_bf16, atol=2e-3, rtol=2e-3), \
        float(jnp.max(jnp.abs(out - ref_bf16)))

    # Loose check vs the full-f32 reference (difference = bf16 operand rounding).
    ref_f32 = _reference_mfm(x, weight, bias)
    assert jnp.allclose(out, ref_f32, atol=5e-2, rtol=5e-2), \
        float(jnp.max(jnp.abs(out - ref_f32)))

    print("KERNEL_OK")
</pallas_src>

<mosaic_0001>
module attributes {stable_mosaic.version = 11 : i64} {
  func.func @_mfm_conv_kernel(%arg0: i32, %arg1: i32, %arg2: memref<2x256xbf16, #tpu.memory_space<vmem>>, %arg3: memref<1x4x512xbf16, #tpu.memory_space<vmem>>, %arg4: memref<16x48xbf16, #tpu.memory_space<vmem>>, %arg5: memref<16x1xf32, #tpu.memory_space<vmem>>, %arg6: memref<1x8x256xf32, #tpu.memory_space<vmem>>, %arg7: memref<48x256xbf16, #tpu.memory_space<vmem>>) attributes {dimension_semantics = [#tpu.dimension_semantics<parallel>, #tpu.dimension_semantics<parallel>], iteration_bounds = array<i64: 2, 1>, scalar_prefetch = 0 : i64, scratch_operands = 1 : i64, tpu.core_type = #tpu.core_type<tc>, window_params = [{transform_indices = @transform_0, window_bounds = array<i64: 2, 256>}, {transform_indices = @transform_1, window_bounds = array<i64: 1, 4, 512>}, {pipeline_mode = #tpu.pipeline_mode<synchronous>, transform_indices = @transform_2, window_bounds = array<i64: 16, 48>}, {pipeline_mode = #tpu.pipeline_mode<synchronous>, transform_indices = @transform_3, window_bounds = array<i64: 16, 1>}, {transform_indices = @transform_4, window_bounds = array<i64: 1, 8, 256>}]} {
    %c256_i32 = arith.constant 256 : i32
    %0 = arith.muli %arg1, %c256_i32 : i32
    %1 = tpu.assume_multiple %0, 128 : i32
    %c0 = arith.constant 0 : index
    %c0_0 = arith.constant 0 : index
    %2 = arith.index_cast %1 : i32 to index
    %3 = vector.load %arg3[%c0, %c0_0, %2] : memref<1x4x512xbf16, #tpu.memory_space<vmem>>, vector<1x4x512xbf16>
    %4 = vector.shape_cast %3 : vector<1x4x512xbf16> to vector<4x512xbf16>
    %c0_1 = arith.constant 0 : index
    %c0_2 = arith.constant 0 : index
    %5 = vector.load %arg2[%c0_1, %c0_2] : memref<2x256xbf16, #tpu.memory_space<vmem>>, vector<1x256xbf16>
    %c1 = arith.constant 1 : index
    %c0_3 = arith.constant 0 : index
    %6 = vector.load %arg2[%c1, %c0_3] : memref<2x256xbf16, #tpu.memory_space<vmem>>, vector<1x256xbf16>
    %7 = vector.extract_strided_slice %4 {offsets = [0, 111], sizes = [4, 256], strides = [1, 1]} : vector<4x512xbf16> to vector<4x256xbf16>
    %8 = vector.broadcast %5 : vector<1x256xbf16> to vector<4x256xbf16>
    %9 = arith.mulf %7, %8 : vector<4x256xbf16>
    %c0_4 = arith.constant 0 : index
    %c0_5 = arith.constant 0 : index
    %10 = vector.load %arg7[%c0_4, %c0_5] : memref<48x256xbf16, #tpu.memory_space<vmem>>, vector<4x256xbf16>
    tpu.vector_store %arg7[%c0_4, %c0_5], %9 {strides = array<i32>} : memref<48x256xbf16, #tpu.memory_space<vmem>>, vector<4x256xbf16>,
    %11 = vector.extract_strided_slice %4 {offsets = [0, 112], sizes = [4, 256], strides = [1, 1]} : vector<4x512xbf16> to vector<4x256xbf16>
    %c4 = arith.constant 4 : index
    %c0_6 = arith.constant 0 : index
    %12 = vector.load %arg7[%c4, %c0_6] : memref<48x256xbf16, #tpu.memory_space<vmem>>, vector<4x256xbf16>
    tpu.vector_store %arg7[%c4, %c0_6], %11 {strides = array<i32>} : memref<48x256xbf16, #tpu.memory_space<vmem>>, vector<4x256xbf16>,
    %13 = vector.extract_strided_slice %4 {offsets = [0, 113], sizes = [4, 256], strides = [1, 1]} : vector<4x512xbf16> to vector<4x256xbf16>
    %14 = vector.broadcast %6 : vector<1x256xbf16> to vector<4x256xbf16>
    %15 = arith.mulf %13, %14 : vector<4x256xbf16>
    %c8 = arith.constant 8 : index
    %c0_7 = arith.constant 0 : index
    %16 = vector.load %arg7[%c8, %c0_7] : memref<48x256xbf16, #tpu.memory_space<vmem>>, vector<4x256xbf16>
    tpu.vector_store %arg7[%c8, %c0_7], %15 {strides = array<i32>} : memref<48x256xbf16, #tpu.memory_space<vmem>>, vector<4x256xbf16>,
    %17 = vector.extract_strided_slice %4 {offsets = [0, 127], sizes = [4, 256], strides = [1, 1]} : vector<4x512xbf16> to vector<4x256xbf16>
    %18 = vector.broadcast %5 : vector<1x256xbf16> to vector<4x256xbf16>
    %19 = arith.mulf %17, %18 : vector<4x256xbf16>
    %c12 = arith.constant 12 : index
    %c0_8 = arith.constant 0 : index
    %20 = vector.load %arg7[%c12, %c0_8] : memref<48x256xbf16, #tpu.memory_space<vmem>>, vector<4x256xbf16>
    tpu.vector_store %arg7[%c12, %c0_8], %19 {strides = array<i32>} : memref<48x256xbf16, #tpu.memory_space<vmem>>, vector<4x256xbf16>,
    %21 = vector.extract_strided_slice %4 {offsets = [0, 128], sizes = [4, 256], strides = [1, 1]} : vector<4x512xbf16> to vector<4x256xbf16>
    %c16 = arith.constant 16 : index
    %c0_9 = arith.constant 0 : index
    %22 = vector.load %arg7[%c16, %c0_9] : memref<48x256xbf16, #tpu.memory_space<vmem>>, vector<4x256xbf16>
    tpu.vector_store %arg7[%c16, %c0_9], %21 {strides = array<i32>} : memref<48x256xbf16, #tpu.memory_space<vmem>>, vector<4x256xbf16>,
    %23 = vector.extract_strided_slice %4 {offsets = [0, 129], sizes = [4, 256], strides = [1, 1]} : vector<4x512xbf16> to vector<4x256xbf16>
    %24 = vector.broadcast %6 : vector<1x256xbf16> to vector<4x256xbf16>
    %25 = arith.mulf %23, %24 : vector<4x256xbf16>
    %c20 = arith.constant 20 : index
    %c0_10 = arith.constant 0 : index
    %26 = vector.load %arg7[%c20, %c0_10] : memref<48x256xbf16, #tpu.memory_space<vmem>>, vector<4x256xbf16>
    tpu.vector_store %arg7[%c20, %c0_10], %25 {strides = array<i32>} : memref<48x256xbf16, #tpu.memory_space<vmem>>, vector<4x256xbf16>,
    %27 = vector.extract_strided_slice %4 {offsets = [0, 143], sizes = [4, 256], strides = [1, 1]} : vector<4x512xbf16> to vector<4x256xbf16>
    %28 = vector.broadcast %5 : vector<1x256xbf16> to vector<4x256xbf16>
    %29 = arith.mulf %27, %28 : vector<4x256xbf16>
    %c24 = arith.constant 24 : index
    %c0_11 = arith.constant 0 : index
    %30 = vector.load %arg7[%c24, %c0_11] : memref<48x256xbf16, #tpu.memory_space<vmem>>, vector<4x256xbf16>
    tpu.vector_store %arg7[%c24, %c0_11], %29 {strides = array<i32>} : memref<48x256xbf16, #tpu.memory_space<vmem>>, vector<4x256xbf16>,
    %31 = vector.extract_strided_slice %4 {offsets = [0, 144], sizes = [4, 256], strides = [1, 1]} : vector<4x512xbf16> to vector<4x256xbf16>
    %c28 = arith.constant 28 : index
    %c0_12 = arith.constant 0 : index
    %32 = vector.load %arg7[%c28, %c0_12] : memref<48x256xbf16, #tpu.memory_space<vmem>>, vector<4x256xbf16>
    tpu.vector_store %arg7[%c28, %c0_12], %31 {strides = array<i32>} : memref<48x256xbf16, #tpu.memory_space<vmem>>, vector<4x256xbf16>,
    %33 = vector.extract_strided_slice %4 {offsets = [0, 145], sizes = [4, 256], strides = [1, 1]} : vector<4x512xbf16> to vector<4x256xbf16>
    %34 = vector.broadcast %6 : vector<1x256xbf16> to vector<4x256xbf16>
    %35 = arith.mulf %33, %34 : vector<4x256xbf16>
    %c32 = arith.constant 32 : index
    %c0_13 = arith.constant 0 : index
    %36 = vector.load %arg7[%c32, %c0_13] : memref<48x256xbf16, #tpu.memory_space<vmem>>, vector<4x256xbf16>
    tpu.vector_store %arg7[%c32, %c0_13], %35 {strides = array<i32>} : memref<48x256xbf16, #tpu.memory_space<vmem>>, vector<4x256xbf16>,
    %cst = arith.constant 0.000000e+00 : bf16
    %37 = vector.broadcast %cst : bf16 to vector<12x256xbf16>
    %c36 = arith.constant 36 : index
    %c0_14 = arith.constant 0 : index
    %38 = vector.load %arg7[%c36, %c0_14] : memref<48x256xbf16, #tpu.memory_space<vmem>>, vector<12x256xbf16>
    tpu.vector_store %arg7[%c36, %c0_14], %37 {strides = array<i32>} : memref<48x256xbf16, #tpu.memory_space<vmem>>, vector<12x256xbf16>,
    %c0_15 = arith.constant 0 : index
    %c0_16 = arith.constant 0 : index
    %39 = vector.load %arg7[%c0_15, %c0_16] : memref<48x256xbf16, #tpu.memory_space<vmem>>, vector<48x256xbf16>
    %c0_17 = arith.constant 0 : index
    %c0_18 = arith.constant 0 : index
    %40 = vector.load %arg4[%c0_17, %c0_18] : memref<16x48xbf16, #tpu.memory_space<vmem>>, vector<16x48xbf16>
    %cst_19 = arith.constant dense<0.000000e+00> : vector<16x256xf32>
    %41 = tpu.matmul %40, %39, %cst_19 {dimension_numbers = #tpu.dot_dimension_numbers<[1], [0], [0], [1], [0, 0, 1, 1], [], []>} : vector<16x48xbf16>, vector<48x256xbf16>, vector<16x256xf32> -> vector<16x256xf32>
    %c0_20 = arith.constant 0 : index
    %c0_21 = arith.constant 0 : index
    %42 = vector.load %arg5[%c0_20, %c0_21] : memref<16x1xf32, #tpu.memory_space<vmem>>, vector<16x1xf32>
    %43 = vector.broadcast %42 : vector<16x1xf32> to vector<16x256xf32>
    %44 = arith.addf %41, %43 : vector<16x256xf32>
    %45 = vector.extract_strided_slice %44 {offsets = [0, 0], sizes = [8, 256], strides = [1, 1]} : vector<16x256xf32> to vector<8x256xf32>
    %46 = vector.extract_strided_slice %44 {offsets = [8, 0], sizes = [8, 256], strides = [1, 1]} : vector<16x256xf32> to vector<8x256xf32>
    %47 = arith.maximumf %45, %46 : vector<8x256xf32>
    %c0_22 = arith.constant 0 : index
    %c0_23 = arith.constant 0 : index
    %c0_24 = arith.constant 0 : index
    %48 = vector.load %arg6[%c0_22, %c0_23, %c0_24] : memref<1x8x256xf32, #tpu.memory_space<vmem>>, vector<1x8x256xf32>
    %49 = vector.shape_cast %48 : vector<1x8x256xf32> to vector<8x256xf32>
    %50 = vector.shape_cast %47 : vector<8x256xf32> to vector<1x8x256xf32>
    tpu.vector_store %arg6[%c0_22, %c0_23, %c0_24], %50 {strides = array<i32>} : memref<1x8x256xf32, #tpu.memory_space<vmem>>, vector<1x8x256xf32>,
    return
  }
  func.func @transform_0(%arg0: i32, %arg1: i32) -> (i32, i32) {
    %c0_i32 = arith.constant 0 : i32
    %c0_i32_0 = arith.constant 0 : i32
    return %c0_i32, %arg1 : i32, i32
  }
  func.func @transform_1(%arg0: i32, %arg1: i32) -> (i32, i32, i32) {
    %c0_i32 = arith.constant 0 : i32
    %c0_i32_0 = arith.constant 0 : i32
    %c0_i32_1 = arith.constant 0 : i32
    return %arg0, %c0_i32, %c0_i32_0 : i32, i32, i32
  }
  func.func @transform_2(%arg0: i32, %arg1: i32) -> (i32, i32) {
    %c0_i32 = arith.constant 0 : i32
    %c0_i32_0 = arith.constant 0 : i32
    %c0_i32_1 = arith.constant 0 : i32
    return %c0_i32, %c0_i32_0 : i32, i32
  }
  func.func @transform_3(%arg0: i32, %arg1: i32) -> (i32, i32) {
    %c0_i32 = arith.constant 0 : i32
    %c0_i32_0 = arith.constant 0 : i32
    %c0_i32_1 = arith.constant 0 : i32
    return %c0_i32, %c0_i32_0 : i32, i32
  }
  func.func @transform_4(%arg0: i32, %arg1: i32) -> (i32, i32, i32) {
    %c0_i32 = arith.constant 0 : i32
    %c0_i32_0 = arith.constant 0 : i32
    return %arg0, %c0_i32, %arg1 : i32, i32, i32
  }
}

</mosaic_0001>

<llo_original>
// kernel: tpu_custom_call.1
$region0: #{tpu_custom_call.1}
  #allocation0 [shape = 'u32[]', space=smem, size = 0x4, offset = 0x4, fixed_abs, tag = 'smem constant byte address 0x4 - core index']
  #allocation1 [shape = 'u32[144,128]{1,0:T(1,128)}', space=vmem, size = 0x12000, scoped, tag = 'internal scratch']
  #allocation2 [shape = 'bf16[48,256]{1,0:T(16,128)(2,1)}', space=vmem, size = 0x6000, scoped, tag = 'scratch operand']
  %s0 = inlined_call_operand.hbm [shape: bf16[2,256], index: 0, kind: input, shape index: {}]
  %s1 = inlined_call_operand.vmem [shape: bf16[2,4,512], index: 1, kind: input, shape index: {}]
  %s2 = inlined_call_operand.vmem [shape: bf16[16,48], index: 2, kind: input, shape index: {}]
  %s3 = inlined_call_operand.vmem [shape: f32[16,1], index: 3, kind: input, shape index: {}]
  %s4 = inlined_call_operand.hbm [shape: f32[2,8,256], index: 4, kind: output, shape index: {}]
  %s5 = sld [smem:[#allocation0]]
  $region53: #{tpu_custom_call.1} parent=0
    _
  %s7 = ssub.s32 1, %s5
  %s8 = scalar_select 0, %s7, %s5
  $region1: #{tpu_custom_call.1} parent=0
    #allocation3 [shape = 'u8[1024]{0}', space=vmem, size = 0x400, scoped, tag = 'input window, operand 0, single buffered']
    #allocation4 [shape = 's32[2]{0}', space=sflag, size = 0x8, scoped, tag = 'scoped memory for tpu_custom_call.1']
    #allocation5 [shape = 's32[2]{0}', space=sflag, size = 0x8, scoped, tag = 'scoped memory for tpu_custom_call.1']
    #allocation6 [shape = 'u8[16384]{0}', space=vmem, size = 0x4000, scoped, tag = 'output window, operand 0']
    %9 = vsyncpa [#allocation4], 0
    %10 = vsyncpa [#allocation5], 0
    %s11 = scalar_lea.sflag [#allocation5], 1
    %12 = vsyncpa %s11, 0
    loop: start=0, step=1, limit=4
    $region2: #{tpu_custom_call.1} parent=1 // loop_pre_header
      _
    $region3: #{tpu_custom_call.1} parent=1 // loop_header
      %s14 = sphi 0, %s18
      %p15 = scmp.ge.s32.totalorder %s14, 4
      %s21 = sphi 0, %s33
      %s22 = sphi 0, %s29
      %s23 = sphi 0, %s21
      %s24 = sphi 0, %s22
      %s25 = sphi 0, %s23
      %s26 = sphi 0, %s24
      %s36 = sphi 0, %s38
      %s39 = sphi 0, %s36
      %s40 = sphi 0, %s39
      %s56 = sphi 0, %s40
      %s62 = sphi 0, %s64
      %s65 = sphi 0, %s62
      %s66 = sphi 0, %s65
      %s82 = sphi 0, %s66
      %s86 = sphi 0, %s86
      %s88 = sphi 0, %s86
      %s89 = sphi 0, %s88
      %s103 = sphi 0, %s89
      %s107 = sphi 0, %s107
      %s109 = sphi 0, %s107
      %s110 = sphi 0, %s109
      %s124 = sphi 0, %s110
      %s132 = sphi 0, %s134
      %s135 = sphi 0, %s132
      %s136 = sphi 0, %s135
      %s152 = sphi 0, %s136
    $region4: #{tpu_custom_call.1} parent=1 // loop_header_branch
      %17 = sbr.rel (%p15) target = $region8
    $region5: #{tpu_custom_call.1} parent=1 // loop_body
      %s19 = ssub.s32 %s14, 1
      %s20 = ssub.s32 %s14, 2
      %s27 = sadd.s32 1, %s22
      %p28 = scmp.ge.s32.totalorder %s27, 1
      %s29 = scalar_select %p28, 0, %s27
      %s30 = sadd.s32 1, %s21
      %s31 = scalar_select %p28, %s30, %s21
      %p32 = scmp.ge.s32.totalorder %s31, 2
      %s33 = scalar_select %p32, 0, %s31
      %s34 = ssub.s32 %s22, %s29
      %p35 = scmp.eq.s32.totalorder %s34, 0
      %s37 = sadd.s32 %s36, 1
      %s38 = scalar_select %p35, %s36, %s37
      %p41 = pneg %p35
      %p42 = scmp.eq.s32.totalorder %s14, 1
      %p43 = por %p41, %p42
      %p44 = scmp.ne.s32.totalorder %s36, %s39
      %p45 = scmp.eq.s32.totalorder %s14, 0
      %p46 = por %p44, %p45
      %p47 = scmp.ne.s32.totalorder %s36, %s39
      %p48 = scmp.eq.s32.totalorder %s19, 1
      %p49 = por %p47, %p48
      %p50 = scmp.ne.s32.totalorder %s39, %s40
      %p51 = scmp.eq.s32.totalorder %s19, 0
      %p52 = por %p50, %p51
      %p53 = scmp.ne.s32.totalorder %s39, %s40
      %p54 = scmp.eq.s32.totalorder %s20, 1
      %p55 = por %p53, %p54
      %p57 = scmp.ne.s32.totalorder %s40, %s56
      %p58 = scmp.eq.s32.totalorder %s20, 0
      %p59 = por %p57, %p58
      %s60 = ssub.s32 %s21, %s33
      %p61 = scmp.eq.s32.totalorder %s60, 0
      %s63 = sadd.s32 %s62, 1
      %s64 = scalar_select %p61, %s62, %s63
      %p67 = pneg %p61
      %p68 = scmp.eq.s32.totalorder %s14, 1
      %p69 = por %p67, %p68
      %p70 = scmp.ne.s32.totalorder %s62, %s65
      %p71 = scmp.eq.s32.totalorder %s14, 0
      %p72 = por %p70, %p71
      %p73 = scmp.ne.s32.totalorder %s62, %s65
      %p74 = scmp.eq.s32.totalorder %s19, 1
      %p75 = por %p73, %p74
      %p76 = scmp.ne.s32.totalorder %s65, %s66
      %p77 = scmp.eq.s32.totalorder %s19, 0
      %p78 = por %p76, %p77
      %p79 = scmp.ne.s32.totalorder %s65, %s66
      %p80 = scmp.eq.s32.totalorder %s20, 1
      %p81 = por %p79, %p80
      %p83 = scmp.ne.s32.totalorder %s66, %s82
      %p84 = scmp.eq.s32.totalorder %s20, 0
      %p85 = por %p83, %p84
      %s87 = sadd.s32 %s86, 1
      %p90 = scmp.eq.s32.totalorder %s14, 1
      %p91 = scmp.ne.s32.totalorder %s86, %s88
      %p92 = scmp.eq.s32.totalorder %s14, 0
      %p93 = por %p91, %p92
      %p94 = scmp.ne.s32.totalorder %s86, %s88
      %p95 = scmp.eq.s32.totalorder %s19, 1
      %p96 = por %p94, %p95
      %p97 = scmp.ne.s32.totalorder %s88, %s89
      %p98 = scmp.eq.s32.totalorder %s19, 0
      %p99 = por %p97, %p98
      %p100 = scmp.ne.s32.totalorder %s88, %s89
      %p101 = scmp.eq.s32.totalorder %s20, 1
      %p102 = por %p100, %p101
      %p104 = scmp.ne.s32.totalorder %s89, %s103
      %p105 = scmp.eq.s32.totalorder %s20, 0
      %p106 = por %p104, %p105
      %s108 = sadd.s32 %s107, 1
      %p111 = scmp.eq.s32.totalorder %s14, 1
      %p112 = scmp.ne.s32.totalorder %s107, %s109
      %p113 = scmp.eq.s32.totalorder %s14, 0
      %p114 = por %p112, %p113
      %p115 = scmp.ne.s32.totalorder %s107, %s109
      %p116 = scmp.eq.s32.totalorder %s19, 1
      %p117 = por %p115, %p116
      %p118 = scmp.ne.s32.totalorder %s109, %s110
      %p119 = scmp.eq.s32.totalorder %s19, 0
      %p120 = por %p118, %p119
      %p121 = scmp.ne.s32.totalorder %s109, %s110
      %p122 = scmp.eq.s32.totalorder %s20, 1
      %p123 = por %p121, %p122
      %p125 = scmp.ne.s32.totalorder %s110, %s124
      %p126 = scmp.eq.s32.totalorder %s20, 0
      %p127 = por %p125, %p126
      %s128 = ssub.s32 %s21, %s33
      %s129 = ssub.s32 %s22, %s29
      %s130 = sor.u32 %s128, %s129
      %p131 = scmp.eq.s32.totalorder %s130, 0
      %s133 = sadd.s32 %s132, 1
      %s134 = scalar_select %p131, %s132, %s133
      %p137 = pneg %p131
      %p138 = scmp.eq.s32.totalorder %s14, 1
      %p139 = por %p137, %p138
      %p140 = scmp.ne.s32.totalorder %s132, %s135
      %p141 = scmp.eq.s32.totalorder %s14, 0
      %p142 = por %p140, %p141
      %p143 = scmp.ne.s32.totalorder %s132, %s135
      %p144 = scmp.eq.s32.totalorder %s19, 1
      %p145 = por %p143, %p144
      %p146 = scmp.ne.s32.totalorder %s135, %s136
      %p147 = scmp.eq.s32.totalorder %s19, 0
      %p148 = por %p146, %p147
      %p149 = scmp.ne.s32.totalorder %s135, %s136
      %p150 = scmp.eq.s32.totalorder %s20, 1
      %p151 = por %p149, %p150
      %p153 = scmp.ne.s32.totalorder %s136, %s152
      %p154 = scmp.eq.s32.totalorder %s20, 0
      %p155 = por %p153, %p154
      %p156 = scmp.le.s32.totalorder 1, %s14
      %p157 = scmp.lt.s32.totalorder %s14, 3
      %p158 = pnand %p156, %p157
      %p159 = pneg %p158
      // Predicated region
      $region9: #{tpu_custom_call.1} parent=5 // pred_check
        _
      $region10: #{tpu_custom_call.1} parent=5 // pred_check_branch
        %161 = sbr.rel (%p158) target = $region12
      $region11: #{tpu_custom_call.1} parent=5 // pred_region
        %s162 = ssub.s32 %s14, 1
        // Predicated region
        $region13: #{tpu_custom_call.1} parent=11 // pred_check
          %p163 = pneg %p52
        $region14: #{tpu_custom_call.1} parent=11 // pred_check_branch
          %165 = sbr.rel (%p163) target = $region16
        $region15: #{tpu_custom_call.1} parent=11 // pred_region
          %s166 = smul.u32 2, %s24
          %s168 = ssub.s32 32, 32
          %169 = vsyncadd [#allocation4], %s168
          %s170 = smul.addr %s166, 16
          %s171 = scalar_lea.hbm %s0, %s170
          %s173 = sshll.u32 [#allocation3], 4
          %s174 = int_to_ptr.vmem [resolvable:$true] %s173
          %176 = dma.hbm_to_vmem [thread:$0]  %s171, 32, %s174, [#allocation4]
        $region16: #{tpu_custom_call.1} parent=11 // pred_fallthru
          _
        // Predicated region
        $region17: #{tpu_custom_call.1} parent=11 // pred_check
          %p177 = pneg %p99
        $region18: #{tpu_custom_call.1} parent=11 // pred_check_branch
          %179 = sbr.rel (%p177) target = $region20
        $region19: #{tpu_custom_call.1} parent=11 // pred_region
          _
        $region20: #{tpu_custom_call.1} parent=11 // pred_fallthru
          _
        // Predicated region
        $region21: #{tpu_custom_call.1} parent=11 // pred_check
          %p180 = pneg %p120
        $region22: #{tpu_custom_call.1} parent=11 // pred_check_branch
          %182 = sbr.rel (%p180) target = $region24
        $region23: #{tpu_custom_call.1} parent=11 // pred_region
          _
        $region24: #{tpu_custom_call.1} parent=11 // pred_fallthru
          _
      $region12: #{tpu_custom_call.1} parent=5 // pred_fallthru
        _
      %p183 = scmp.lt.s32.totalorder %s14, 2
      // Predicated region
      $region25: #{tpu_custom_call.1} parent=5 // pred_check
        %p184 = pneg %p183
      $region26: #{tpu_custom_call.1} parent=5 // pred_check_branch
        %186 = sbr.rel (%p184) target = $region28
      $region27: #{tpu_custom_call.1} parent=5 // pred_region
        // Predicated region
        $region29: #{tpu_custom_call.1} parent=27 // pred_check
          %p187 = pneg %p72
        $region30: #{tpu_custom_call.1} parent=27 // pred_check_branch
          %189 = sbr.rel (%p187) target = $region32
        $region31: #{tpu_custom_call.1} parent=27 // pred_region
          %p190 = scmp.lt.s32.totalorder %s21, 1
          %s191 = scalar_select %p190, %s21, 1
          %s192 = smul.addr %s191, 4
          %s193 = smul.addr %s192, 2
          %s194 = scalar_lea.vmem %s1, %s193
        $region32: #{tpu_custom_call.1} parent=27 // pred_fallthru
          _
      $region28: #{tpu_custom_call.1} parent=5 // pred_fallthru
        _
      %p195 = scmp.le.s32.totalorder 1, %s14
      %p196 = scmp.lt.s32.totalorder %s14, 3
      %p197 = pnand %p195, %p196
      %p198 = pneg %p197
      // Predicated region
      $region33: #{tpu_custom_call.1} parent=5 // pred_check
        _
      $region34: #{tpu_custom_call.1} parent=5 // pred_check_branch
        %200 = sbr.rel (%p197) target = $region36
      $region35: #{tpu_custom_call.1} parent=5 // pred_region
        %s201 = ssub.s32 %s14, 1
        // Predicated region
        $region37: #{tpu_custom_call.1} parent=35 // pred_check
          %p202 = pneg %p52
        $region38: #{tpu_custom_call.1} parent=35 // pred_check_branch
          %204 = sbr.rel (%p202) target = $region40
        $region39: #{tpu_custom_call.1} parent=35 // pred_region
          %205 = dma.done [#allocation4], 32
        $region40: #{tpu_custom_call.1} parent=35 // pred_fallthru
          _
        %p206 = pneg %p52
        %p207 = pneg %p49
        %p208 = scmp.lt.s32.totalorder %s23, 1
        %s209 = scalar_select %p208, %s23, 1
        %s210 = smul.addr %s209, 4
        %s211 = smul.addr %s210, 2
        %s212 = scalar_lea.vmem %s1, %s211
        %p213 = pneg %p78
        %p214 = pneg %p75
        %p215 = pneg %p99
        %p216 = pneg %p96
        %p217 = pneg %p120
        %p218 = pneg %p117
        %p219 = pneg %p148
        %p220 = pneg %p145
        %s221 = sand.u32 %s135, 1
        %s222 = scalar_lea.sflag [#allocation5], %s221
        %s223 = sand.u32 %s135, 1
        %s224 = smul.addr %s223, 16
        %s225 = scalar_lea.vmem [#allocation6], %s224
        %s226 = smul.u32 2, %s24
        %p227 = scmp.lt.s32.totalorder %s23, 1
        %s228 = scalar_select %p227, %s23, 1
        %s229 = smul.addr %s228, 4
        %s230 = smul.addr %s229, 2
        %s231 = scalar_lea.vmem %s1, %s230
        %s232 = smul.u32 2, %s24
        %s234 = smul.u32 %s24, 256
        %s235 = sshra.s32 %s234, 7
        %s236 = sand.u32 %s234, 127
        %s237 = smul.addr %s235, 2
        %s238 = scalar_lea.vmem %s231, %s237
        %v239 = vld [vmem:[%s238] sm:$0xff]
        %v240 = vld [vmem:[#allocation3] sm:$0x3]
        %v243 = vunpack.c.l.s4 1966171168
        %v244 = vunpack.c.0.s8 %v243
        %v245 = vlaneseq
        %v246 = vshrl.u32 %v245, 7
        %v247 = vsub.s32 %v244, %v246
        %v248 = vrot.slane %v240, %v247
        %v249 = vcombine.high %v248, %v248
        %v251 = vunpack.c.l.s4 1966171168
        %v252 = vunpack.c.0.s8 %v251
        %v253 = vlaneseq
        %v254 = vshrl.u32 %v253, 7
        %v255 = vsub.s32 %v252, %v254
        %v256 = vrot.slane %v248, %v255
        %v258 = vunpack.c.l.s4 1966171168
        %v259 = vunpack.c.0.s8 %v258
        %v260 = vlaneseq
        %v261 = vshrl.u32 %v260, 7
        %v262 = vsub.s32 %v259, %v261
        %v263 = vrot.slane %v249, %v262
        %v265 = vpack.i.b16 %v256, %v256
        %v267 = vlaneseq
        %v268 = vshrl.u32 %v267, 7
        %v269 = vsub.s32 0, %v268
        %v270 = vrot.slane %v265, %v269
        %v272 = vpack.i.b16 %v263, %v263
        %v274 = vlaneseq
        %v275 = vshrl.u32 %v274, 7
        %v276 = vsub.s32 0, %v275
        %v277 = vrot.slane %v272, %v276
        %v280 = vcombine.low %v270, %v277
        %v282 = vunpack.c.l.s4 1983009808
        %v283 = vunpack.c.0.s8 %v282
        %v284 = vlaneseq
        %v285 = vshrl.u32 %v284, 7
        %v286 = vsub.s32 %v283, %v285
        %v287 = vrot.slane %v280, %v286
        %288 = vrot.lane.b32.xlu0 %v287, 111
        %v289 = vpop.permute.xlu0 %288
        %v290 = vrot.slane %v289, 6
        %vm291 = vcmask 908288
        %v292 = vsel %vm291, %v290, %v289
        %v294 = vmul.bf16 %v239, %v292
        %v296 = vcombine.high %v294, %v294
        %v298 = vunpack.c.l.s4 1983009808
        %v299 = vunpack.c.0.s8 %v298
        %v300 = vlaneseq
        %v301 = vshrl.u32 %v300, 7
        %v302 = vsub.s32 %v299, %v301
        %v303 = vrot.slane %v294, %v302
        %v305 = vunpack.c.l.s4 1983009808
        %v306 = vunpack.c.0.s8 %v305
        %v307 = vlaneseq
        %v308 = vshrl.u32 %v307, 7
        %v309 = vsub.s32 %v306, %v308
        %v310 = vrot.slane %v296, %v309
        %v311 = vcombine.high %v303, %v303
        %312 = vrot.lane.b32.xlu0 %v303, 17
        %v313 = vpop.permute.xlu0 %312
        %314 = vrot.lane.b32.xlu0 %v311, 17
        %v315 = vpop.permute.xlu0 %314
        %316 = vrot.lane.b32.xlu0 %v310, 17
        %v317 = vpop.permute.xlu0 %316
        %vm318 = vcmask 138240
        %v319 = vsel %vm318, %v313, %v315
        %v320 = vsel %vm318, %v315, %v317
        %323 = vst [vmem:[#allocation2] sm:$0x3] %v319
        %324 = vst [vmem:[#allocation2 + $0x8] sm:$0x3] %v320
        %v326 = vcombine.low %v239, %v239
        %v328 = vunpack.c.l.s4 1983009808
        %v329 = vunpack.c.0.s8 %v328
        %v330 = vlaneseq
        %v331 = vshrl.u32 %v330, 7
        %v332 = vsub.s32 %v329, %v331
        %v333 = vrot.slane %v326, %v332
        %v335 = vunpack.c.l.s4 1983009808
        %v336 = vunpack.c.0.s8 %v335
        %v337 = vlaneseq
        %v338 = vshrl.u32 %v337, 7
        %v339 = vsub.s32 %v336, %v338
        %v340 = vrot.slane %v239, %v339
        %v341 = vcombine.high %v333, %v333
        %342 = vrot.lane.b32.xlu0 %v333, 16
        %v343 = vpop.permute.xlu0 %342
        %344 = vrot.lane.b32.xlu0 %v341, 16
        %v345 = vpop.permute.xlu0 %344
        %346 = vrot.lane.b32.xlu0 %v340, 16
        %v347 = vpop.permute.xlu0 %346
        %vm348 = vcmask 130048
        %v349 = vsel %vm348, %v343, %v345
        %v350 = vsel %vm348, %v345, %v347
        %353 = vst [vmem:[#allocation2] sm:$0xc] %v349
        %354 = vst [vmem:[#allocation2 + $0x8] sm:$0xc] %v350
        %v355 = vshrl.u32 %v256, 16
        %v356 = vpack.i.b16 %v355, %v355
        %v358 = vlaneseq
        %v359 = vshrl.u32 %v358, 7
        %v360 = vsub.s32 0, %v359
        %v361 = vrot.slane %v356, %v360
        %v362 = vshrl.u32 %v263, 16
        %v363 = vpack.i.b16 %v362, %v362
        %v365 = vlaneseq
        %v366 = vshrl.u32 %v365, 7
        %v367 = vsub.s32 0, %v366
        %v368 = vrot.slane %v363, %v367
        %v371 = vcombine.low %v361, %v368
        %v373 = vunpack.c.l.s4 1983009808
        %v374 = vunpack.c.0.s8 %v373
        %v375 = vlaneseq
        %v376 = vshrl.u32 %v375, 7
        %v377 = vsub.s32 %v374, %v376
        %v378 = vrot.slane %v371, %v377
        %379 = vrot.lane.b32.xlu0 %v378, 113
        %v380 = vpop.permute.xlu0 %379
        %v381 = vrot.slane %v380, 6
        %vm382 = vcmask 924672
        %v383 = vsel %vm382, %v381, %v380
        %v385 = vmul.bf16 %v239, %v383
        %v387 = vcombine.high %v385, %v385
        %v389 = vunpack.c.l.s4 1983009808
        %v390 = vunpack.c.0.s8 %v389
        %v391 = vlaneseq
        %v392 = vshrl.u32 %v391, 7
        %v393 = vsub.s32 %v390, %v392
        %v394 = vrot.slane %v385, %v393
        %v396 = vunpack.c.l.s4 1983009808
        %v397 = vunpack.c.0.s8 %v396
        %v398 = vlaneseq
        %v399 = vshrl.u32 %v398, 7
        %v400 = vsub.s32 %v397, %v399
        %v401 = vrot.slane %v387, %v400
        %v402 = vcombine.low %v394, %v394
        %v403 = vcombine.low %v401, %v401
        %404 = vrot.lane.b32.xlu0 %v402, 15
        %v405 = vpop.permute.xlu0 %404
        %406 = vrot.lane.b32.xlu0 %v394, 15
        %v407 = vpop.permute.xlu0 %406
        %408 = vrot.lane.b32.xlu0 %v403, 15
        %v409 = vpop.permute.xlu0 %408
        %vm410 = vcmask 121856
        %v411 = vsel %vm410, %v405, %v407
        %v412 = vsel %vm410, %v407, %v409
        %415 = vst [vmem:[#allocation2] sm:$0x30] %v411
        %416 = vst [vmem:[#allocation2 + $0x8] sm:$0x30] %v412
        %417 = vrot.lane.b32.xlu0 %v287, 127
        %v418 = vpop.permute.xlu0 %417
        %v419 = vrot.slane %v418, 6
        %vm420 = vcmask 1039360
        %v421 = vsel %vm420, %v419, %v418
        %v423 = vmul.bf16 %v239, %v421
        %v425 = vcombine.low %v423, %v423
        %v427 = vunpack.c.l.s4 1983009808
        %v428 = vunpack.c.0.s8 %v427
        %v429 = vlaneseq
        %v430 = vshrl.u32 %v429, 7
        %v431 = vsub.s32 %v428, %v430
        %v432 = vrot.slane %v425, %v431
        %v434 = vunpack.c.l.s4 1983009808
        %v435 = vunpack.c.0.s8 %v434
        %v436 = vlaneseq
        %v437 = vshrl.u32 %v436, 7
        %v438 = vsub.s32 %v435, %v437
        %v439 = vrot.slane %v423, %v438
        %v440 = vcombine.low %v432, %v432
        %v441 = vcombine.low %v439, %v439
        %442 = vrot.lane.b32.xlu0 %v440, 1
        %v443 = vpop.permute.xlu0 %442
        %444 = vrot.lane.b32.xlu0 %v432, 1
        %v445 = vpop.permute.xlu0 %444
        %446 = vrot.lane.b32.xlu0 %v441, 1
        %v447 = vpop.permute.xlu0 %446
        %vm448 = vcmask 7168
        %v449 = vsel %vm448, %v443, %v445
        %v450 = vsel %vm448, %v445, %v447
        %453 = vst [vmem:[#allocation2] sm:$0xc0] %v449
        %454 = vst [vmem:[#allocation2 + $0x8] sm:$0xc0] %v450
        %v455 = vcombine.high %v239, %v239
        %v457 = vunpack.c.l.s4 1983009808
        %v458 = vunpack.c.0.s8 %v457
        %v459 = vlaneseq
        %v460 = vshrl.u32 %v459, 7
        %v461 = vsub.s32 %v458, %v460
        %v462 = vrot.slane %v455, %v461
        %v463 = vcombine.high %v340, %v340
        %466 = vst [vmem:[#allocation2 + $0x10] sm:$0x3] %v463
        %467 = vst [vmem:[#allocation2 + $0x18] sm:$0x3] %v462
        %468 = vrot.lane.b32.xlu0 %v239, 127
        %v469 = vpop.permute.xlu0 %468
        %v470 = vrot.slane %v469, 2
        %v471 = vrot.slane %v469, 4
        %v472 = vsel %vm420, %v470, %v471
        %v475 = vmul.bf16 %v472, %v378
        %v477 = vcombine.low %v475, %v475
        %v479 = vunpack.c.l.s4 1983009808
        %v480 = vunpack.c.0.s8 %v479
        %v481 = vlaneseq
        %v482 = vshrl.u32 %v481, 7
        %v483 = vsub.s32 %v480, %v482
        %v484 = vrot.slane %v477, %v483
        %v485 = vcombine.high %v484, %v484
        %488 = vst [vmem:[#allocation2 + $0x10] sm:$0xc] %v484
        %489 = vst [vmem:[#allocation2 + $0x18] sm:$0xc] %v485
        %490 = vrot.lane.b32.xlu0 %v239, 113
        %v491 = vpop.permute.xlu0 %490
        %v492 = vrot.slane %v491, 2
        %v493 = vrot.slane %v491, 4
        %v494 = vsel %vm382, %v492, %v493
        %v497 = vmul.bf16 %v494, %v287
        %v500 = vunpack.c.l.s4 1983009808
        %v501 = vunpack.c.0.s8 %v500
        %v502 = vlaneseq
        %v503 = vshrl.u32 %v502, 7
        %v504 = vsub.s32 %v501, %v503
        %v505 = vrot.slane %v497, %v504
        %v506 = vcombine.low %v505, %v505
        %509 = vst [vmem:[#allocation2 + $0x10] sm:$0x30] %v506
        %510 = vst [vmem:[#allocation2 + $0x18] sm:$0x30] %v505
        %v511 = vcombine.low %v340, %v340
        %512 = vrot.lane.b32.xlu0 %v333, 112
        %v513 = vpop.permute.xlu0 %512
        %514 = vrot.lane.b32.xlu0 %v511, 112
        %v515 = vpop.permute.xlu0 %514
        %516 = vrot.lane.b32.xlu0 %v340, 112
        %v517 = vpop.permute.xlu0 %516
        %vm518 = vcmask 916480
        %v519 = vsel %vm518, %v513, %v515
        %v520 = vsel %vm518, %v515, %v517
        %523 = vst [vmem:[#allocation2 + $0x10] sm:$0xc0] %v519
        %524 = vst [vmem:[#allocation2 + $0x18] sm:$0xc0] %v520
        %525 = vrot.lane.b32.xlu0 %v239, 111
        %v526 = vpop.permute.xlu0 %525
        %v527 = vrot.slane %v526, 2
        %v528 = vrot.slane %v526, 4
        %v529 = vsel %vm291, %v527, %v528
        %v531 = vmul.bf16 %v529, %v378
        %v534 = vunpack.c.l.s4 1983009808
        %v535 = vunpack.c.0.s8 %v534
        %v536 = vlaneseq
        %v537 = vshrl.u32 %v536, 7
        %v538 = vsub.s32 %v535, %v537
        %v539 = vrot.slane %v531, %v538
        %v540 = vcombine.high %v539, %v539
        %543 = vst [vmem:[#allocation2 + $0x20] sm:$0x3] %v539
        %544 = vst [vmem:[#allocation2 + $0x28] sm:$0x3] %v540
        %545 = vst [vmem:[#allocation2 + $0x20] sm:$0xfc] 0
        %546 = vst [vmem:[#allocation2 + $0x28] sm:$0xfc] 0
        %v547 = vld [vmem:[#allocation2] sm:$0xff]
        %v548 = vld [vmem:[#allocation2 + $0x8] sm:$0xff]
        %v549 = vld [vmem:[#allocation2 + $0x10] sm:$0xff]
        %v550 = vld [vmem:[#allocation2 + $0x18] sm:$0xff]
        %v551 = vld [vmem:[#allocation2 + $0x20] sm:$0xff]
        %v552 = vld [vmem:[#allocation2 + $0x28] sm:$0xff]
        %v553 = vld [vmem:[%s2] sm:$0xf]
        %v554 = vld [vmem:[%s2 + $0x4] sm:$0xf]
        %v555 = vld [vmem:[%s3] sm:$0xff]
        %v556 = vld [vmem:[%s3 + $0x8] sm:$0xff]
        %558 = vset.pattern.permute.xlu0 0
        %559 = vperm.xlu0 %558, %v555
        %v560 = vpop.permute.xlu0 %559
        %563 = vset.pattern.permute.xlu0 0
        %564 = vperm.xlu0 %563, %v556
        %v565 = vpop.permute.xlu0 %564
        %v569 = vunpack.c.l.b16 %v553
        %v570 = vunpack.c.l.b16 %v554
        %v571 = vpack.c.b16 %v570, %v569
        %vm572 = vcmask 392192
        %v574 = vsel %vm572, %v571, 0
        %576 = vmatprep.subr.bf16.mxu0 %v548
        %577 = vmatpush1.bf16.msra.mxu0 %v547
        %578 = vmatprep.subr.bf16.mxu0 %v550
        %579 = vmatpush1.bf16.msra.mxu0 %v549
        %580 = vmatprep.subr.bf16.mxu0 %v552
        %581 = vmatpush1.bf16.msra.mxu0 %v551
        %582 = vmatprep.subr.bf16.mxu0 0
        %583 = vmatpush1.bf16.msra.mxu0 0
        %584 = vmatprep.subr.bf16.mxu0 0
        %585 = vmatpush1.bf16.msra.mxu0 0
        %586 = vmatprep.subr.bf16.mxu0 0
        %587 = vmatpush1.bf16.msra.mxu0 0
        %588 = vmatprep.subr.bf16.mxu0 0
        %589 = vmatpush1.bf16.msra.mxu0 0
        %590 = vmatprep.subr.bf16.mxu0 0
        %591 = vmatpush1.bf16.msra.mxu0 0
        %592 = vmatprep.subr.bf16.mxu0 0
        %593 = vmatpush1.bf16.msra.mxu0 0
        %594 = vmatprep.subr.bf16.mxu0 0
        %595 = vmatpush1.bf16.msra.mxu0 0
        %596 = vmatprep.subr.bf16.mxu0 0
        %597 = vmatpush1.bf16.msra.mxu0 0
        %598 = vmatprep.subr.bf16.mxu0 0
        %599 = vmatpush1.bf16.msra.mxu0 0
        %600 = vmatprep.subr.bf16.mxu0 0
        %601 = vmatpush1.bf16.msra.mxu0 0
        %602 = vmatprep.subr.bf16.mxu0 0
        %603 = vmatpush1.bf16.msra.mxu0 0
        %604 = vmatprep.subr.bf16.mxu0 0
        %605 = vmatpush1.bf16.msra.mxu0 0
        %606 = vmatprep.subr.bf16.mxu0 0
        %607 = vmatpush1.bf16.msra.mxu0 0
        %608 = vmatprep.mubr.bf16.mxu0 0
        %609 = vmatmul.mubr.bf16.gmra.mrb[0].mxu0 %v574
        %v610 = vpop.f32.mrb[0].mxu0
        %v611 = vadd.f32 %v560, %v610
        %v612 = vpop.f32.mrb[0].mxu0
        %v613 = vadd.f32 %v560, %v612
        %v614 = vpop.f32.mrb[0].mxu0
        %v615 = vadd.f32 %v565, %v614
        %v616 = vpop.f32.mrb[0].mxu0
        %v617 = vadd.f32 %v565, %v616
        %618 = vdwg.mxu0
        %v619 = vmax.f32 %v611, %v615
        %v620 = vmax.f32 %v613, %v617
        %621 = vst [vmem:[%s225] sm:$0xff] %v619
        %622 = vst [vmem:[%s225 + $0x8] sm:$0xff] %v620
        %s623 = sand.u32 %s135, 1
        %s624 = scalar_lea.sflag [#allocation5], %s623
        %s625 = sand.u32 %s135, 1
        %s626 = smul.addr %s625, 16
        %s627 = scalar_lea.vmem [#allocation6], %s626
        // Predicated region
        $region41: #{tpu_custom_call.1} parent=35 // pred_check
          %p628 = pneg %p145
        $region42: #{tpu_custom_call.1} parent=35 // pred_check_branch
          %630 = sbr.rel (%p628) target = $region44
        $region43: #{tpu_custom_call.1} parent=35 // pred_region
          %s631 = smul.u32 2, %s24
          %s633 = ssub.s32 256, 256
          %634 = vsyncadd %s624, %s633
          %s635 = smul.addr %s23, 2
          %s636 = sadd.s32 %s631, %s635
          %s637 = smul.addr %s636, 128
          %s638 = scalar_lea.hbm %s4, %s637
          %s640 = sshll.u32 %s627, 4
          %s641 = int_to_ptr.vmem [resolvable:$true] %s640
          %643 = dma.vmem_to_hbm [thread:$0]  %s641, 256, %s638, %s624
        $region44: #{tpu_custom_call.1} parent=35 // pred_fallthru
          _
      $region36: #{tpu_custom_call.1} parent=5 // pred_fallthru
        _
      %p644 = scmp.le.s32.totalorder 2, %s14
      // Predicated region
      $region45: #{tpu_custom_call.1} parent=5 // pred_check
        %p645 = pneg %p644
      $region46: #{tpu_custom_call.1} parent=5 // pred_check_branch
        %647 = sbr.rel (%p645) target = $region48
      $region47: #{tpu_custom_call.1} parent=5 // pred_region
        %s648 = ssub.s32 %s14, 2
        // Predicated region
        $region49: #{tpu_custom_call.1} parent=47 // pred_check
          %p649 = pneg %p151
        $region50: #{tpu_custom_call.1} parent=47 // pred_check_branch
          %651 = sbr.rel (%p649) target = $region52
        $region51: #{tpu_custom_call.1} parent=47 // pred_region
          %s652 = sand.u32 %s136, 1
          %s653 = scalar_lea.sflag [#allocation5], %s652
          %s654 = sand.u32 %s136, 1
          %s655 = smul.addr %s654, 16
          %s656 = scalar_lea.vmem [#allocation6], %s655
          %657 = dma.done %s653, 256
        $region52: #{tpu_custom_call.1} parent=47 // pred_fallthru
          _
      $region48: #{tpu_custom_call.1} parent=5 // pred_fallthru
        _
    $region6: #{tpu_custom_call.1} parent=1 // loop_footer
      %s18 = sadd.s32 1, %s14
    $region7: #{tpu_custom_call.1} parent=1 // loop_footer_branch
      %13 = sbr.rel target = $region3
    $region8: #{tpu_custom_call.1} parent=1 // loop_exit
      _
    %658 = vsyncpa [#allocation4], 1
    %s659 = scalar_lea.sflag [#allocation4], 1
    %660 = vsyncpa %s659, 1
    %661 = vsyncpa [#allocation5], 1
    %s662 = scalar_lea.sflag [#allocation5], 1
    %663 = vsyncpa %s662, 1

</llo_original>
